<compile_context>
chip_gen: v6e
topology: v6e:2x2x1
jax: 0.10.0
libtpu: 0.0.40
codegen_flags: <defaults>
</compile_context>

<pallas_src>
import jax
import jax.numpy as jnp
from jax.experimental import pallas as pl
from jax.experimental.pallas import tpu as pltpu

KERNEL_SIZES = (5, 4, 3)
OUT_CHANNELS = 32
HIGHWAY_LAYERS = 2
LANE = 128
B_TILE_MAX = 512      # fits comfortably in v7x's 64 MiB VMEM with 2x buffering


def _round_up(x, m):
    return (x + m - 1) // m * m


# --------------------------------------------------------------------------
# Pallas kernel: fused conv (all branches/taps) -> relu -> max-pool -> highway
# --------------------------------------------------------------------------
def _make_kernel(win_w, n_chars, emb_dim, e_pad, n_highway):
    def kernel(x_ref, w_ref, b_ref, hwp_ref, hwg_ref, hbp_ref, hbg_ref,
               conv_ref, out_ref):
        bt = x_ref.shape[0]
        # (bt, C+win-1, D); convert once to f32 so the slices/concat/reshape
        # below are layout no-ops (f32 sublane tiling matches C=8).
        xp = x_ref[...].astype(jnp.float32)

        # im2col: one lane-concat of win_w shifted views -> (bt, C, win*D).
        win = jnp.concatenate(
            [xp[:, s:s + n_chars, :] for s in range(win_w)], axis=-1)
        win2 = win.reshape(bt * n_chars, win_w * emb_dim).astype(jnp.bfloat16)

        # Single fused conv matmul (all branches, all taps), f32 accumulation.
        acc = jnp.dot(win2, w_ref[...], preferred_element_type=jnp.float32)
        conv = jnp.maximum(acc + b_ref[...], 0.0)            # (bt*C, e_pad)
        conv3 = conv.reshape(bt, n_chars, e_pad)
        conv_ref[...] = conv3                                 # lane-dense store

        # max_pool1d over the full char axis.
        h = jnp.max(conv3, axis=1)                            # (bt, e_pad) f32

        # Highway (pie style): proj=relu(Wp h+bp), gate=sigmoid(Wg h+bg),
        # h = gate*h + (1-gate)*proj.  Gating math stays f32 (v5e has no bf16
        # VPU/EUP); only MXU operands are bf16.
        for l in range(n_highway):
            hb = h.astype(jnp.bfloat16)
            proj = jnp.maximum(
                jnp.dot(hb, hwp_ref[l], preferred_element_type=jnp.float32)
                + hbp_ref[l], 0.0)
            gate = jax.nn.sigmoid(
                jnp.dot(hb, hwg_ref[l], preferred_element_type=jnp.float32)
                + hbg_ref[l])
            h = gate * h + (1.0 - gate) * proj
        out_ref[...] = h

    return kernel


# --------------------------------------------------------------------------
# Param init (PyTorch-equivalent layout) and one-time kernel param preparation
# --------------------------------------------------------------------------
def init_params(key, num_embeddings, char_emb_dim, out_channels,
                kernel_sizes, highway_layers, padding_idx=0):
    D, O = char_emb_dim, out_channels
    E = O * len(kernel_sizes)
    keys = jax.random.split(key, 4 + 2 * len(kernel_sizes))
    emb = jax.random.normal(keys[0], (num_embeddings, D), jnp.float32) * 0.1
    if padding_idx is not None:
        emb = emb.at[padding_idx].set(0.0)
    conv_w, conv_b = [], []
    for i, K in enumerate(kernel_sizes):
        # PyTorch conv weight is (O, 1, D, K); ours is (K, D, O) (same math).
        conv_w.append(jax.random.normal(keys[1 + i], (K, D, O), jnp.float32) * 0.1)
        conv_b.append(jax.random.normal(keys[1 + len(kernel_sizes) + i],
                                        (1, O), jnp.float32) * 0.01)
    hwp = jax.random.normal(keys[-3], (highway_layers, E, E), jnp.float32) * 0.1
    hwg = jax.random.normal(keys[-2], (highway_layers, E, E), jnp.float32) * 0.1
    hbp = jnp.zeros((highway_layers, 1, E), jnp.float32)
    hbg = jnp.ones((highway_layers, 1, E), jnp.float32)   # gate bias = 1 (pie init)
    return dict(emb=emb, conv_w=conv_w, conv_b=conv_b,
                hwp=hwp, hwg=hwg, hbp=hbp, hbg=hbg)


def prepare_kernel_params(params, kernel_sizes=KERNEL_SIZES):
    """Build fused / lane-padded / bf16 parameters for the Pallas kernel (once)."""
    D = params['emb'].shape[1]
    O = params['conv_w'][0].shape[-1]
    E = O * len(kernel_sizes)
    e_pad = _round_up(E, LANE)
    max_left = max(K // 2 - 1 for K in kernel_sizes)
    max_right = max(K - K // 2 for K in kernel_sizes)
    win_w = max_left + max_right + 1

    # Fuse all branches/taps into one (win*D, e_pad) matrix + one bias row.
    w_all = jnp.zeros((win_w * D, e_pad), jnp.float32)
    b_all = jnp.zeros((1, e_pad), jnp.float32)
    for j, (w, b, K) in enumerate(zip(params['conv_w'], params['conv_b'],
                                      kernel_sizes)):
        left = K // 2 - 1
        s0 = max_left - left                 # tap t lands at window offset s0+t
        w_all = w_all.at[s0 * D:(s0 + K) * D, j * O:(j + 1) * O].set(
            w.reshape(K * D, O))
        b_all = b_all.at[:, j * O:(j + 1) * O].set(b)

    L = params['hwp'].shape[0]

    def pad_w(w):                            # (L, E, E) -> (L, e_pad, e_pad)
        return jnp.pad(w, ((0, 0), (0, e_pad - E), (0, e_pad - E)))

    def pad_b(b):                            # (L, 1, E) -> (L, 1, e_pad)
        return jnp.pad(b, ((0, 0), (0, 0), (0, e_pad - E)))

    # bf16 embedding table with an extra all-zero row used as the pad index,
    # so char-axis zero padding and B padding fold directly into the gather.
    emb_ext = jnp.concatenate(
        [params['emb'], jnp.zeros((1, D), params['emb'].dtype)], axis=0)

    return dict(
        emb=emb_ext.astype(jnp.bfloat16),
        pad_index=params['emb'].shape[0],
        w_all=w_all.astype(jnp.bfloat16),
        b_all=b_all,
        hwp=pad_w(params['hwp']).astype(jnp.bfloat16),
        hwg=pad_w(params['hwg']).astype(jnp.bfloat16),
        hbp=pad_b(params['hbp']),
        hbg=pad_b(params['hbg']),
        meta=dict(D=D, O=O, E=E, e_pad=e_pad, win_w=win_w,
                  max_left=max_left, max_right=max_right, n_highway=L),
    )


# --------------------------------------------------------------------------
# Plain-JAX glue
# --------------------------------------------------------------------------
def pad_flat_batch(flat, nwords_arr, maxlen):
    """(sum(nwords), E) -> (maxlen, num_sents, E), zero padded (torch_utils.pad_flat_batch)."""
    starts = jnp.concatenate(
        [jnp.zeros((1,), jnp.int32), jnp.cumsum(nwords_arr)[:-1].astype(jnp.int32)])
    idx = starts[None, :] + jnp.arange(maxlen, dtype=jnp.int32)[:, None]   # (maxlen, S)
    valid = jnp.arange(maxlen)[:, None] < nwords_arr[None, :]
    gathered = jnp.take(flat, jnp.clip(idx, 0, flat.shape[0] - 1), axis=0)
    return jnp.where(valid[..., None], gathered, 0.0)


def cnn_embedding_forward(char, nchars, nwords, kparams, b_tile_max=B_TILE_MAX):
    # char: (C, B) int32 (char positions, flat words) — same as PyTorch module.
    # nchars is unused in the PyTorch forward as well (kept for API parity).
    del nchars
    m = kparams['meta']
    C, B = char.shape
    D, e_pad, win_w = m['D'], m['e_pad'], m['win_w']
    max_left, max_right = m['max_left'], m['max_right']
    E, L = m['E'], m['n_highway']

    b_tile = min(b_tile_max, _round_up(B, 8))
    b_pad = _round_up(B, b_tile)

    # Transpose/pad the tiny int32 index tensor (not the f32 activations) and
    # gather bf16 embeddings directly into the (B_pad, C+win-1, D) kernel layout.
    pad_idx = kparams['pad_index']
    char_bc = jnp.transpose(char, (1, 0))                          # (B, C)
    char_bc = jnp.pad(char_bc, ((0, b_pad - B), (max_left, max_right)),
                      constant_values=pad_idx)
    x = jnp.take(kparams['emb'], char_bc, axis=0)                  # (B_pad, C+w-1, D) bf16

    grid = (b_pad // b_tile,)
    kernel = _make_kernel(win_w, C, D, e_pad, L)
    conv_outs, pooled = pl.pallas_call(
        kernel,
        grid=grid,
        in_specs=[
            pl.BlockSpec((b_tile, C + win_w - 1, D), lambda i: (i, 0, 0)),
            pl.BlockSpec((win_w * D, e_pad), lambda i: (0, 0)),      # fused conv W
            pl.BlockSpec((1, e_pad), lambda i: (0, 0)),              # fused conv b
            pl.BlockSpec((L, e_pad, e_pad), lambda i: (0, 0, 0)),    # highway Wp
            pl.BlockSpec((L, e_pad, e_pad), lambda i: (0, 0, 0)),    # highway Wg
            pl.BlockSpec((L, 1, e_pad), lambda i: (0, 0, 0)),        # highway bp
            pl.BlockSpec((L, 1, e_pad), lambda i: (0, 0, 0)),        # highway bg
        ],
        out_specs=(
            pl.BlockSpec((b_tile, C, e_pad), lambda i: (i, 0, 0)),
            pl.BlockSpec((b_tile, e_pad), lambda i: (i, 0)),
        ),
        out_shape=(jax.ShapeDtypeStruct((b_pad, C, e_pad), jnp.float32),
                   jax.ShapeDtypeStruct((b_pad, e_pad), jnp.float32)),
        compiler_params=pltpu.CompilerParams(
            dimension_semantics=("parallel",)),
    )(x, kparams['w_all'], kparams['b_all'],
      kparams['hwp'], kparams['hwg'], kparams['hbp'], kparams['hbg'])

    pooled = pooled[:B, :E]                                        # strip B/lane padding
    conv_outs = conv_outs[:B, :, :E]

    maxlen = max(nwords)                                           # static python int
    nwords_arr = jnp.asarray(nwords, jnp.int32)
    conv_out = pad_flat_batch(pooled, nwords_arr, maxlen)          # (maxlen, S, E)
    conv_outs = jnp.transpose(conv_outs, (1, 0, 2))                # (C, B, E)
    return conv_out, conv_outs


# --------------------------------------------------------------------------
# Pure-JAX f32 reference (no Pallas) with identical semantics
# --------------------------------------------------------------------------
def reference_forward(char, nwords, params, kernel_sizes=KERNEL_SIZES):
    emb = jnp.take(params['emb'], char, axis=0)
    x = jnp.transpose(emb, (1, 0, 2))
    max_left = max(K // 2 - 1 for K in kernel_sizes)
    max_right = max(K - K // 2 for K in kernel_sizes)
    x_pad = jnp.pad(x, ((0, 0), (max_left, max_right), (0, 0)))
    B, C, _ = x.shape
    outs = []
    for w, b, K in zip(params['conv_w'], params['conv_b'], kernel_sizes):
        left = K // 2 - 1
        acc = sum(jnp.einsum('bcd,do->bco',
                             x_pad[:, (t - left + max_left):(t - left + max_left + C), :],
                             w[t]) for t in range(K))
        outs.append(jax.nn.relu(acc + b[0][None, None, :]))
    conv_outs = jnp.concatenate(outs, axis=-1)            # (B, C, E)
    h = conv_outs.max(axis=1)
    for l in range(params['hwp'].shape[0]):
        proj = jax.nn.relu(h @ params['hwp'][l] + params['hbp'][l][0])
        gate = jax.nn.sigmoid(h @ params['hwg'][l] + params['hbg'][l][0])
        h = gate * h + (1.0 - gate) * proj
    conv_out = pad_flat_batch(h, jnp.asarray(nwords, jnp.int32), max(nwords))
    return conv_out, jnp.transpose(conv_outs, (1, 0, 2))


if __name__ == "__main__":
    key = jax.random.PRNGKey(0)
    k_param, k_char = jax.random.split(key)

    num_embeddings = 30        # char vocab size
    char_emb_dim = 16          # nn.Embedding dim (the __init__ `embedding_dim`)
    nwords = [3, 5]            # words per sentence -> flat batch B = 8
    B = sum(nwords)
    C = 8                      # chars per word (char sequence length)
    E = OUT_CHANNELS * len(KERNEL_SIZES)   # 96

    params = init_params(k_param, num_embeddings, char_emb_dim,
                         OUT_CHANNELS, KERNEL_SIZES, HIGHWAY_LAYERS,
                         padding_idx=0)
    kparams = prepare_kernel_params(params, KERNEL_SIZES)

    char = jax.random.randint(k_char, (C, B), 0, num_embeddings, dtype=jnp.int32)
    nchars = jnp.full((B,), C, jnp.int32)   # unused by forward (parity with PyTorch)

    conv_out, conv_outs = cnn_embedding_forward(char, nchars, nwords, kparams)
    jax.block_until_ready((conv_out, conv_outs))

    assert conv_out.shape == (max(nwords), len(nwords), E)
    assert conv_outs.shape == (C, B, E)

    ref_out, ref_outs = reference_forward(char, nwords, params)
    # bf16 MXU operands with f32 accumulation -> compare vs f32 reference at 1e-2.
    assert jnp.allclose(conv_out, ref_out, atol=1e-2, rtol=1e-2), \
        float(jnp.max(jnp.abs(conv_out - ref_out)))
    assert jnp.allclose(conv_outs, ref_outs, atol=1e-2, rtol=1e-2), \
        float(jnp.max(jnp.abs(conv_outs - ref_outs)))

    print("KERNEL_OK")
</pallas_src>

<mosaic_0001>
module attributes {stable_mosaic.version = 11 : i64} {
  func.func @kernel(%arg0: i32, %arg1: memref<8x12x16xbf16, #tpu.memory_space<vmem>>, %arg2: memref<80x128xbf16, #tpu.memory_space<vmem>>, %arg3: memref<1x128xf32, #tpu.memory_space<vmem>>, %arg4: memref<2x128x128xbf16, #tpu.memory_space<vmem>>, %arg5: memref<2x128x128xbf16, #tpu.memory_space<vmem>>, %arg6: memref<2x1x128xf32, #tpu.memory_space<vmem>>, %arg7: memref<2x1x128xf32, #tpu.memory_space<vmem>>, %arg8: memref<8x8x128xf32, #tpu.memory_space<vmem>>, %arg9: memref<8x128xf32, #tpu.memory_space<vmem>>) attributes {dimension_semantics = [#tpu.dimension_semantics<parallel>], iteration_bounds = array<i64: 1>, scalar_prefetch = 0 : i64, scratch_operands = 0 : i64, tpu.core_type = #tpu.core_type<tc>, window_params = [{transform_indices = @transform_0, window_bounds = array<i64: 8, 12, 16>}, {pipeline_mode = #tpu.pipeline_mode<synchronous>, transform_indices = @transform_1, window_bounds = array<i64: 80, 128>}, {pipeline_mode = #tpu.pipeline_mode<synchronous>, transform_indices = @transform_2, window_bounds = array<i64: 1, 128>}, {pipeline_mode = #tpu.pipeline_mode<synchronous>, transform_indices = @transform_3, window_bounds = array<i64: 2, 128, 128>}, {pipeline_mode = #tpu.pipeline_mode<synchronous>, transform_indices = @transform_4, window_bounds = array<i64: 2, 128, 128>}, {pipeline_mode = #tpu.pipeline_mode<synchronous>, transform_indices = @transform_5, window_bounds = array<i64: 2, 1, 128>}, {pipeline_mode = #tpu.pipeline_mode<synchronous>, transform_indices = @transform_6, window_bounds = array<i64: 2, 1, 128>}, {transform_indices = @transform_7, window_bounds = array<i64: 8, 8, 128>}, {transform_indices = @transform_8, window_bounds = array<i64: 8, 128>}]} {
    %c0 = arith.constant 0 : index
    %c0_0 = arith.constant 0 : index
    %c0_1 = arith.constant 0 : index
    %0 = vector.load %arg1[%c0, %c0_0, %c0_1] : memref<8x12x16xbf16, #tpu.memory_space<vmem>>, vector<8x12x16xbf16>
    %1 = arith.extf %0 : vector<8x12x16xbf16> to vector<8x12x16xf32>
    %2 = vector.extract_strided_slice %1 {offsets = [0, 0, 0], sizes = [8, 8, 16], strides = [1, 1, 1]} : vector<8x12x16xf32> to vector<8x8x16xf32>
    %3 = vector.extract_strided_slice %1 {offsets = [0, 1, 0], sizes = [8, 8, 16], strides = [1, 1, 1]} : vector<8x12x16xf32> to vector<8x8x16xf32>
    %4 = vector.extract_strided_slice %1 {offsets = [0, 2, 0], sizes = [8, 8, 16], strides = [1, 1, 1]} : vector<8x12x16xf32> to vector<8x8x16xf32>
    %5 = vector.extract_strided_slice %1 {offsets = [0, 3, 0], sizes = [8, 8, 16], strides = [1, 1, 1]} : vector<8x12x16xf32> to vector<8x8x16xf32>
    %6 = vector.extract_strided_slice %1 {offsets = [0, 4, 0], sizes = [8, 8, 16], strides = [1, 1, 1]} : vector<8x12x16xf32> to vector<8x8x16xf32>
    %7 = tpu.concatenate %2, %3, %4, %5, %6 in 2 : vector<8x8x16xf32>, vector<8x8x16xf32>, vector<8x8x16xf32>, vector<8x8x16xf32>, vector<8x8x16xf32> -> vector<8x8x80xf32>
    %8 = vector.shape_cast %7 : vector<8x8x80xf32> to vector<64x80xf32>
    %9 = arith.truncf %8 : vector<64x80xf32> to vector<64x80xbf16>
    %c0_2 = arith.constant 0 : index
    %c0_3 = arith.constant 0 : index
    %10 = vector.load %arg2[%c0_2, %c0_3] : memref<80x128xbf16, #tpu.memory_space<vmem>>, vector<80x128xbf16>
    %cst = arith.constant dense<0.000000e+00> : vector<64x128xf32>
    %11 = tpu.matmul %9, %10, %cst {dimension_numbers = #tpu.dot_dimension_numbers<[1], [0], [0], [1], [0, 0, 1, 1], [], []>} : vector<64x80xbf16>, vector<80x128xbf16>, vector<64x128xf32> -> vector<64x128xf32>
    %c0_4 = arith.constant 0 : index
    %c0_5 = arith.constant 0 : index
    %12 = vector.load %arg3[%c0_4, %c0_5] : memref<1x128xf32, #tpu.memory_space<vmem>>, vector<1x128xf32>
    %13 = vector.broadcast %12 : vector<1x128xf32> to vector<64x128xf32>
    %14 = arith.addf %11, %13 : vector<64x128xf32>
    %cst_6 = arith.constant 0.000000e+00 : f32
    %15 = vector.broadcast %cst_6 : f32 to vector<64x128xf32>
    %16 = arith.maximumf %14, %15 : vector<64x128xf32>
    %17 = vector.shape_cast %16 : vector<64x128xf32> to vector<8x8x128xf32>
    %c0_7 = arith.constant 0 : index
    %c0_8 = arith.constant 0 : index
    %c0_9 = arith.constant 0 : index
    %18 = vector.load %arg8[%c0_7, %c0_8, %c0_9] : memref<8x8x128xf32, #tpu.memory_space<vmem>>, vector<8x8x128xf32>
    tpu.vector_store %arg8[%c0_7, %c0_8, %c0_9], %17 {strides = array<i32>} : memref<8x8x128xf32, #tpu.memory_space<vmem>>, vector<8x8x128xf32>,
    %cst_10 = arith.constant dense<0xFF800000> : vector<8x128xf32>
    %19 = vector.multi_reduction <maximumf>, %17, %cst_10 [1] : vector<8x8x128xf32> to vector<8x128xf32>
    %20 = arith.truncf %19 : vector<8x128xf32> to vector<8x128xbf16>
    %c0_11 = arith.constant 0 : index
    %c0_12 = arith.constant 0 : index
    %c0_13 = arith.constant 0 : index
    %21 = vector.load %arg4[%c0_11, %c0_12, %c0_13] : memref<2x128x128xbf16, #tpu.memory_space<vmem>>, vector<1x128x128xbf16>
    %22 = vector.shape_cast %21 : vector<1x128x128xbf16> to vector<128x128xbf16>
    %cst_14 = arith.constant dense<0.000000e+00> : vector<8x128xf32>
    %23 = tpu.matmul %20, %22, %cst_14 {dimension_numbers = #tpu.dot_dimension_numbers<[1], [0], [0], [1], [0, 0, 1, 1], [], []>} : vector<8x128xbf16>, vector<128x128xbf16>, vector<8x128xf32> -> vector<8x128xf32>
    %c0_15 = arith.constant 0 : index
    %c0_16 = arith.constant 0 : index
    %c0_17 = arith.constant 0 : index
    %24 = vector.load %arg6[%c0_15, %c0_16, %c0_17] : memref<2x1x128xf32, #tpu.memory_space<vmem>>, vector<1x1x128xf32>
    %25 = vector.shape_cast %24 : vector<1x1x128xf32> to vector<1x128xf32>
    %26 = vector.broadcast %25 : vector<1x128xf32> to vector<8x128xf32>
    %27 = arith.addf %23, %26 : vector<8x128xf32>
    %cst_18 = arith.constant 0.000000e+00 : f32
    %28 = vector.broadcast %cst_18 : f32 to vector<8x128xf32>
    %29 = arith.maximumf %27, %28 : vector<8x128xf32>
    %c0_19 = arith.constant 0 : index
    %c0_20 = arith.constant 0 : index
    %c0_21 = arith.constant 0 : index
    %30 = vector.load %arg5[%c0_19, %c0_20, %c0_21] : memref<2x128x128xbf16, #tpu.memory_space<vmem>>, vector<1x128x128xbf16>
    %31 = vector.shape_cast %30 : vector<1x128x128xbf16> to vector<128x128xbf16>
    %cst_22 = arith.constant dense<0.000000e+00> : vector<8x128xf32>
    %32 = tpu.matmul %20, %31, %cst_22 {dimension_numbers = #tpu.dot_dimension_numbers<[1], [0], [0], [1], [0, 0, 1, 1], [], []>} : vector<8x128xbf16>, vector<128x128xbf16>, vector<8x128xf32> -> vector<8x128xf32>
    %c0_23 = arith.constant 0 : index
    %c0_24 = arith.constant 0 : index
    %c0_25 = arith.constant 0 : index
    %33 = vector.load %arg7[%c0_23, %c0_24, %c0_25] : memref<2x1x128xf32, #tpu.memory_space<vmem>>, vector<1x1x128xf32>
    %34 = vector.shape_cast %33 : vector<1x1x128xf32> to vector<1x128xf32>
    %35 = vector.broadcast %34 : vector<1x128xf32> to vector<8x128xf32>
    %36 = arith.addf %32, %35 : vector<8x128xf32>
    %37 = arith.negf %36 : vector<8x128xf32>
    %38 = math.exp %37 : vector<8x128xf32>
    %cst_26 = arith.constant 1.000000e+00 : f32
    %39 = vector.broadcast %cst_26 : f32 to vector<8x128xf32>
    %40 = arith.addf %39, %38 : vector<8x128xf32>
    %41 = arith.divf %39, %40 : vector<8x128xf32>
    %42 = arith.mulf %41, %19 : vector<8x128xf32>
    %cst_27 = arith.constant 1.000000e+00 : f32
    %43 = vector.broadcast %cst_27 : f32 to vector<8x128xf32>
    %44 = arith.subf %43, %41 : vector<8x128xf32>
    %45 = arith.mulf %44, %29 : vector<8x128xf32>
    %46 = arith.addf %42, %45 : vector<8x128xf32>
    %47 = arith.truncf %46 : vector<8x128xf32> to vector<8x128xbf16>
    %c1 = arith.constant 1 : index
    %c0_28 = arith.constant 0 : index
    %c0_29 = arith.constant 0 : index
    %48 = vector.load %arg4[%c1, %c0_28, %c0_29] : memref<2x128x128xbf16, #tpu.memory_space<vmem>>, vector<1x128x128xbf16>
    %49 = vector.shape_cast %48 : vector<1x128x128xbf16> to vector<128x128xbf16>
    %cst_30 = arith.constant dense<0.000000e+00> : vector<8x128xf32>
    %50 = tpu.matmul %47, %49, %cst_30 {dimension_numbers = #tpu.dot_dimension_numbers<[1], [0], [0], [1], [0, 0, 1, 1], [], []>} : vector<8x128xbf16>, vector<128x128xbf16>, vector<8x128xf32> -> vector<8x128xf32>
    %c1_31 = arith.constant 1 : index
    %c0_32 = arith.constant 0 : index
    %c0_33 = arith.constant 0 : index
    %51 = vector.load %arg6[%c1_31, %c0_32, %c0_33] : memref<2x1x128xf32, #tpu.memory_space<vmem>>, vector<1x1x128xf32>
    %52 = vector.shape_cast %51 : vector<1x1x128xf32> to vector<1x128xf32>
    %53 = vector.broadcast %52 : vector<1x128xf32> to vector<8x128xf32>
    %54 = arith.addf %50, %53 : vector<8x128xf32>
    %cst_34 = arith.constant 0.000000e+00 : f32
    %55 = vector.broadcast %cst_34 : f32 to vector<8x128xf32>
    %56 = arith.maximumf %54, %55 : vector<8x128xf32>
    %c1_35 = arith.constant 1 : index
    %c0_36 = arith.constant 0 : index
    %c0_37 = arith.constant 0 : index
    %57 = vector.load %arg5[%c1_35, %c0_36, %c0_37] : memref<2x128x128xbf16, #tpu.memory_space<vmem>>, vector<1x128x128xbf16>
    %58 = vector.shape_cast %57 : vector<1x128x128xbf16> to vector<128x128xbf16>
    %cst_38 = arith.constant dense<0.000000e+00> : vector<8x128xf32>
    %59 = tpu.matmul %47, %58, %cst_38 {dimension_numbers = #tpu.dot_dimension_numbers<[1], [0], [0], [1], [0, 0, 1, 1], [], []>} : vector<8x128xbf16>, vector<128x128xbf16>, vector<8x128xf32> -> vector<8x128xf32>
    %c1_39 = arith.constant 1 : index
    %c0_40 = arith.constant 0 : index
    %c0_41 = arith.constant 0 : index
    %60 = vector.load %arg7[%c1_39, %c0_40, %c0_41] : memref<2x1x128xf32, #tpu.memory_space<vmem>>, vector<1x1x128xf32>
    %61 = vector.shape_cast %60 : vector<1x1x128xf32> to vector<1x128xf32>
    %62 = vector.broadcast %61 : vector<1x128xf32> to vector<8x128xf32>
    %63 = arith.addf %59, %62 : vector<8x128xf32>
    %64 = arith.negf %63 : vector<8x128xf32>
    %65 = math.exp %64 : vector<8x128xf32>
    %cst_42 = arith.constant 1.000000e+00 : f32
    %66 = vector.broadcast %cst_42 : f32 to vector<8x128xf32>
    %67 = arith.addf %66, %65 : vector<8x128xf32>
    %68 = arith.divf %66, %67 : vector<8x128xf32>
    %69 = arith.mulf %68, %46 : vector<8x128xf32>
    %cst_43 = arith.constant 1.000000e+00 : f32
    %70 = vector.broadcast %cst_43 : f32 to vector<8x128xf32>
    %71 = arith.subf %70, %68 : vector<8x128xf32>
    %72 = arith.mulf %71, %56 : vector<8x128xf32>
    %73 = arith.addf %69, %72 : vector<8x128xf32>
    %c0_44 = arith.constant 0 : index
    %c0_45 = arith.constant 0 : index
    %74 = vector.load %arg9[%c0_44, %c0_45] : memref<8x128xf32, #tpu.memory_space<vmem>>, vector<8x128xf32>
    tpu.vector_store %arg9[%c0_44, %c0_45], %73 {strides = array<i32>} : memref<8x128xf32, #tpu.memory_space<vmem>>, vector<8x128xf32>,
    return
  }
  func.func @transform_0(%arg0: i32) -> (i32, i32, i32) {
    %c0_i32 = arith.constant 0 : i32
    %c0_i32_0 = arith.constant 0 : i32
    %c0_i32_1 = arith.constant 0 : i32
    return %arg0, %c0_i32, %c0_i32_0 : i32, i32, i32
  }
  func.func @transform_1(%arg0: i32) -> (i32, i32) {
    %c0_i32 = arith.constant 0 : i32
    %c0_i32_0 = arith.constant 0 : i32
    %c0_i32_1 = arith.constant 0 : i32
    return %c0_i32, %c0_i32_0 : i32, i32
  }
  func.func @transform_2(%arg0: i32) -> (i32, i32) {
    %c0_i32 = arith.constant 0 : i32
    %c0_i32_0 = arith.constant 0 : i32
    %c0_i32_1 = arith.constant 0 : i32
    return %c0_i32, %c0_i32_0 : i32, i32
  }
  func.func @transform_3(%arg0: i32) -> (i32, i32, i32) {
    %c0_i32 = arith.constant 0 : i32
    %c0_i32_0 = arith.constant 0 : i32
    %c0_i32_1 = arith.constant 0 : i32
    %c0_i32_2 = arith.constant 0 : i32
    return %c0_i32, %c0_i32_0, %c0_i32_1 : i32, i32, i32
  }
  func.func @transform_4(%arg0: i32) -> (i32, i32, i32) {
    %c0_i32 = arith.constant 0 : i32
    %c0_i32_0 = arith.constant 0 : i32
    %c0_i32_1 = arith.constant 0 : i32
    %c0_i32_2 = arith.constant 0 : i32
    return %c0_i32, %c0_i32_0, %c0_i32_1 : i32, i32, i32
  }
  func.func @transform_5(%arg0: i32) -> (i32, i32, i32) {
    %c0_i32 = arith.constant 0 : i32
    %c0_i32_0 = arith.constant 0 : i32
    %c0_i32_1 = arith.constant 0 : i32
    %c0_i32_2 = arith.constant 0 : i32
    return %c0_i32, %c0_i32_0, %c0_i32_1 : i32, i32, i32
  }
  func.func @transform_6(%arg0: i32) -> (i32, i32, i32) {
    %c0_i32 = arith.constant 0 : i32
    %c0_i32_0 = arith.constant 0 : i32
    %c0_i32_1 = arith.constant 0 : i32
    %c0_i32_2 = arith.constant 0 : i32
    return %c0_i32, %c0_i32_0, %c0_i32_1 : i32, i32, i32
  }
  func.func @transform_7(%arg0: i32) -> (i32, i32, i32) {
    %c0_i32 = arith.constant 0 : i32
    %c0_i32_0 = arith.constant 0 : i32
    %c0_i32_1 = arith.constant 0 : i32
    return %arg0, %c0_i32, %c0_i32_0 : i32, i32, i32
  }
  func.func @transform_8(%arg0: i32) -> (i32, i32) {
    %c0_i32 = arith.constant 0 : i32
    %c0_i32_0 = arith.constant 0 : i32
    return %arg0, %c0_i32 : i32, i32
  }
}

</mosaic_0001>

<llo_original>
// kernel: tpu_custom_call.1
$region0: #{tpu_custom_call.1}
  #allocation0 [shape = 'u32[]', space=smem, size = 0x4, offset = 0x4, fixed_abs, tag = 'smem constant byte address 0x4 - core index']
  #allocation1 [shape = 'u32[144,128]{1,0:T(1,128)}', space=vmem, size = 0x12000, scoped, tag = 'internal scratch']
  %s0 = inlined_call_operand.vmem [shape: bf16[8,12,16], index: 0, kind: input, shape index: {}]
  %s1 = inlined_call_operand.vmem [shape: bf16[80,128], index: 1, kind: input, shape index: {}]
  %s2 = inlined_call_operand.vmem [shape: f32[1,128], index: 2, kind: input, shape index: {}]
  %s3 = inlined_call_operand.hbm [shape: bf16[2,128,128], index: 3, kind: input, shape index: {}]
  %s4 = inlined_call_operand.hbm [shape: bf16[2,128,128], index: 4, kind: input, shape index: {}]
  %s5 = inlined_call_operand.vmem [shape: f32[2,1,128], index: 5, kind: input, shape index: {}]
  %s6 = inlined_call_operand.vmem [shape: f32[2,1,128], index: 6, kind: input, shape index: {}]
  %s7 = inlined_call_operand.hbm [shape: f32[8,8,128], index: 7, kind: output, shape index: {0}]
  %s8 = inlined_call_operand.hbm [shape: f32[8,128], index: 8, kind: output, shape index: {1}]
  %9 = xla_tuple %s7, %s8
  %s10 = sld [smem:[#allocation0]]
  $region54: #{tpu_custom_call.1} parent=0
    _
  %s12 = ssub.s32 1, %s10
  %s13 = scalar_select 0, %s12, %s10
  $region1: #{tpu_custom_call.1} parent=0
    #allocation2 [shape = 'u8[65536]{0}', space=vmem, size = 0x10000, scoped, tag = 'input window, operand 3, single buffered']
    #allocation3 [shape = 's32[1]{0}', space=sflag, size = 0x4, scoped, tag = 'scoped memory for tpu_custom_call.1']
    #allocation4 [shape = 's32[1]{0}', space=sflag, size = 0x4, scoped, tag = 'scoped memory for tpu_custom_call.1']
    #allocation5 [shape = 'u8[65536]{0}', space=vmem, size = 0x10000, scoped, tag = 'input window, operand 4, single buffered']
    #allocation6 [shape = 's32[1]{0}', space=sflag, size = 0x4, scoped, tag = 'scoped memory for tpu_custom_call.1']
    #allocation7 [shape = 'u8[32768]{0}', space=vmem, size = 0x8000, scoped, tag = 'output window, operand 0, single buffered']
    #allocation8 [shape = 'u8[4096]{0}', space=vmem, size = 0x1000, scoped, tag = 'output window, operand 1, single buffered']
    #allocation9 [shape = 's32[1]{0}', space=sflag, size = 0x4, scoped, tag = 'scoped memory for tpu_custom_call.1']
    %14 = vsyncpa [#allocation3], 0
    %15 = vsyncpa [#allocation6], 0
    %16 = vsyncpa [#allocation4], 0
    %17 = vsyncpa [#allocation9], 0
    // Predicated region
    $region2: #{tpu_custom_call.1} parent=1 // pred_check
      _
    $region3: #{tpu_custom_call.1} parent=1 // pred_check_branch
      %19 = sbr.rel (0) target = $region5
    $region4: #{tpu_custom_call.1} parent=1 // pred_region
      _
    $region5: #{tpu_custom_call.1} parent=1 // pred_fallthru
      _
    // Predicated region
    $region6: #{tpu_custom_call.1} parent=1 // pred_check
      _
    $region7: #{tpu_custom_call.1} parent=1 // pred_check_branch
      %21 = sbr.rel (0) target = $region9
    $region8: #{tpu_custom_call.1} parent=1 // pred_region
      _
    $region9: #{tpu_custom_call.1} parent=1 // pred_fallthru
      _
    // Predicated region
    $region10: #{tpu_custom_call.1} parent=1 // pred_check
      _
    $region11: #{tpu_custom_call.1} parent=1 // pred_check_branch
      %23 = sbr.rel (0) target = $region13
    $region12: #{tpu_custom_call.1} parent=1 // pred_region
      _
    $region13: #{tpu_custom_call.1} parent=1 // pred_fallthru
      _
    // Predicated region
    $region14: #{tpu_custom_call.1} parent=1 // pred_check
      _
    $region15: #{tpu_custom_call.1} parent=1 // pred_check_branch
      %25 = sbr.rel (0) target = $region17
    $region16: #{tpu_custom_call.1} parent=1 // pred_region
      %s27 = ssub.s32 2048, 2048
      %28 = vsyncadd [#allocation3], %s27
      %s29 = sshll.u32 [#allocation2], 4
      %s30 = int_to_ptr.vmem [resolvable:$true] %s29
      %35 = dma.hbm_to_vmem [thread:$0]  %s3, 2048, %s30, [#allocation3], 64, 64, 4
    $region17: #{tpu_custom_call.1} parent=1 // pred_fallthru
      _
    // Predicated region
    $region18: #{tpu_custom_call.1} parent=1 // pred_check
      _
    $region19: #{tpu_custom_call.1} parent=1 // pred_check_branch
      %37 = sbr.rel (0) target = $region21
    $region20: #{tpu_custom_call.1} parent=1 // pred_region
      %s39 = ssub.s32 2048, 2048
      %40 = vsyncadd [#allocation6], %s39
      %s41 = sshll.u32 [#allocation5], 4
      %s42 = int_to_ptr.vmem [resolvable:$true] %s41
      %47 = dma.hbm_to_vmem [thread:$0]  %s4, 2048, %s42, [#allocation6], 64, 64, 4
    $region21: #{tpu_custom_call.1} parent=1 // pred_fallthru
      _
    // Predicated region
    $region22: #{tpu_custom_call.1} parent=1 // pred_check
      _
    $region23: #{tpu_custom_call.1} parent=1 // pred_check_branch
      %49 = sbr.rel (0) target = $region25
    $region24: #{tpu_custom_call.1} parent=1 // pred_region
      _
    $region25: #{tpu_custom_call.1} parent=1 // pred_fallthru
      _
    // Predicated region
    $region26: #{tpu_custom_call.1} parent=1 // pred_check
      _
    $region27: #{tpu_custom_call.1} parent=1 // pred_check_branch
      %51 = sbr.rel (0) target = $region29
    $region28: #{tpu_custom_call.1} parent=1 // pred_region
      _
    $region29: #{tpu_custom_call.1} parent=1 // pred_fallthru
      _
    // Predicated region
    $region30: #{tpu_custom_call.1} parent=1 // pred_check
      _
    $region31: #{tpu_custom_call.1} parent=1 // pred_check_branch
      %53 = sbr.rel (0) target = $region33
    $region32: #{tpu_custom_call.1} parent=1 // pred_region
      %54 = dma.done [#allocation3], 2048
    $region33: #{tpu_custom_call.1} parent=1 // pred_fallthru
      _
    // Predicated region
    $region34: #{tpu_custom_call.1} parent=1 // pred_check
      _
    $region35: #{tpu_custom_call.1} parent=1 // pred_check_branch
      %56 = sbr.rel (0) target = $region37
    $region36: #{tpu_custom_call.1} parent=1 // pred_region
      %57 = dma.done [#allocation6], 2048
    $region37: #{tpu_custom_call.1} parent=1 // pred_fallthru
      _
    %v59 = vld [vmem:[%s0] sm:$0xf]
    %v60 = vld [vmem:[%s0 + $0x4] sm:$0x3]
    %v61 = vld [vmem:[%s0 + $0x8] sm:$0xf]
    %v62 = vld [vmem:[%s0 + $0xc] sm:$0x3]
    %v63 = vld [vmem:[%s0 + $0x10] sm:$0xf]
    %v64 = vld [vmem:[%s0 + $0x14] sm:$0x3]
    %v65 = vld [vmem:[%s0 + $0x18] sm:$0xf]
    %v66 = vld [vmem:[%s0 + $0x1c] sm:$0x3]
    %v67 = vld [vmem:[%s0 + $0x20] sm:$0xf]
    %v68 = vld [vmem:[%s0 + $0x24] sm:$0x3]
    %v69 = vld [vmem:[%s0 + $0x28] sm:$0xf]
    %v70 = vld [vmem:[%s0 + $0x2c] sm:$0x3]
    %v71 = vld [vmem:[%s0 + $0x30] sm:$0xf]
    %v72 = vld [vmem:[%s0 + $0x34] sm:$0x3]
    %v73 = vld [vmem:[%s0 + $0x38] sm:$0xf]
    %v74 = vld [vmem:[%s0 + $0x3c] sm:$0x3]
    %v75 = vunpack.c.l.bf16 %v59
    %v76 = vunpack.c.l.bf16 %v60
    %v77 = vunpack.c.l.bf16 %v61
    %v78 = vunpack.c.l.bf16 %v62
    %v79 = vunpack.c.l.bf16 %v63
    %v80 = vunpack.c.l.bf16 %v64
    %v81 = vunpack.c.l.bf16 %v65
    %v82 = vunpack.c.l.bf16 %v66
    %v83 = vunpack.c.l.bf16 %v67
    %v84 = vunpack.c.l.bf16 %v68
    %v85 = vunpack.c.l.bf16 %v69
    %v86 = vunpack.c.l.bf16 %v70
    %v87 = vunpack.c.l.bf16 %v71
    %v88 = vunpack.c.l.bf16 %v72
    %v89 = vunpack.c.l.bf16 %v73
    %v90 = vunpack.c.l.bf16 %v74
    %vm107 = vcmask 1046528
    %v108 = vrot.slane %v75, 1
    %v109 = vrot.slane %v76, 1
    %v110 = vsel %vm107, %v108, %v109
    %v111 = vrot.slane %v77, 1
    %v112 = vrot.slane %v78, 1
    %v113 = vsel %vm107, %v111, %v112
    %v114 = vrot.slane %v79, 1
    %v115 = vrot.slane %v80, 1
    %v116 = vsel %vm107, %v114, %v115
    %v117 = vrot.slane %v81, 1
    %v118 = vrot.slane %v82, 1
    %v119 = vsel %vm107, %v117, %v118
    %v120 = vrot.slane %v83, 1
    %v121 = vrot.slane %v84, 1
    %v122 = vsel %vm107, %v120, %v121
    %v123 = vrot.slane %v85, 1
    %v124 = vrot.slane %v86, 1
    %v125 = vsel %vm107, %v123, %v124
    %v126 = vrot.slane %v87, 1
    %v127 = vrot.slane %v88, 1
    %v128 = vsel %vm107, %v126, %v127
    %v129 = vrot.slane %v89, 1
    %v130 = vrot.slane %v90, 1
    %v131 = vsel %vm107, %v129, %v130
    %132 = vrot.lane.b32.xlu0 %v110, 16
    %v133 = vpop.permute.xlu0 %132
    %134 = vrot.lane.b32.xlu0 %v113, 16
    %v135 = vpop.permute.xlu0 %134
    %136 = vrot.lane.b32.xlu0 %v116, 16
    %v137 = vpop.permute.xlu0 %136
    %138 = vrot.lane.b32.xlu0 %v119, 16
    %v139 = vpop.permute.xlu0 %138
    %140 = vrot.lane.b32.xlu0 %v122, 16
    %v141 = vpop.permute.xlu0 %140
    %142 = vrot.lane.b32.xlu0 %v125, 16
    %v143 = vpop.permute.xlu0 %142
    %144 = vrot.lane.b32.xlu0 %v128, 16
    %v145 = vpop.permute.xlu0 %144
    %146 = vrot.lane.b32.xlu0 %v131, 16
    %v147 = vpop.permute.xlu0 %146
    %vm156 = vcmask 1045504
    %v157 = vrot.slane %v75, 2
    %v158 = vrot.slane %v76, 2
    %v159 = vsel %vm156, %v157, %v158
    %v160 = vrot.slane %v77, 2
    %v161 = vrot.slane %v78, 2
    %v162 = vsel %vm156, %v160, %v161
    %v163 = vrot.slane %v79, 2
    %v164 = vrot.slane %v80, 2
    %v165 = vsel %vm156, %v163, %v164
    %v166 = vrot.slane %v81, 2
    %v167 = vrot.slane %v82, 2
    %v168 = vsel %vm156, %v166, %v167
    %v169 = vrot.slane %v83, 2
    %v170 = vrot.slane %v84, 2
    %v171 = vsel %vm156, %v169, %v170
    %v172 = vrot.slane %v85, 2
    %v173 = vrot.slane %v86, 2
    %v174 = vsel %vm156, %v172, %v173
    %v175 = vrot.slane %v87, 2
    %v176 = vrot.slane %v88, 2
    %v177 = vsel %vm156, %v175, %v176
    %v178 = vrot.slane %v89, 2
    %v179 = vrot.slane %v90, 2
    %v180 = vsel %vm156, %v178, %v179
    %181 = vrot.lane.b32.xlu0 %v159, 32
    %v182 = vpop.permute.xlu0 %181
    %183 = vrot.lane.b32.xlu0 %v162, 32
    %v184 = vpop.permute.xlu0 %183
    %185 = vrot.lane.b32.xlu0 %v165, 32
    %v186 = vpop.permute.xlu0 %185
    %187 = vrot.lane.b32.xlu0 %v168, 32
    %v188 = vpop.permute.xlu0 %187
    %189 = vrot.lane.b32.xlu0 %v171, 32
    %v190 = vpop.permute.xlu0 %189
    %191 = vrot.lane.b32.xlu0 %v174, 32
    %v192 = vpop.permute.xlu0 %191
    %193 = vrot.lane.b32.xlu0 %v177, 32
    %v194 = vpop.permute.xlu0 %193
    %195 = vrot.lane.b32.xlu0 %v180, 32
    %v196 = vpop.permute.xlu0 %195
    %vm205 = vcmask 1044480
    %v206 = vrot.slane %v75, 3
    %v207 = vrot.slane %v76, 3
    %v208 = vsel %vm205, %v206, %v207
    %v209 = vrot.slane %v77, 3
    %v210 = vrot.slane %v78, 3
    %v211 = vsel %vm205, %v209, %v210
    %v212 = vrot.slane %v79, 3
    %v213 = vrot.slane %v80, 3
    %v214 = vsel %vm205, %v212, %v213
    %v215 = vrot.slane %v81, 3
    %v216 = vrot.slane %v82, 3
    %v217 = vsel %vm205, %v215, %v216
    %v218 = vrot.slane %v83, 3
    %v219 = vrot.slane %v84, 3
    %v220 = vsel %vm205, %v218, %v219
    %v221 = vrot.slane %v85, 3
    %v222 = vrot.slane %v86, 3
    %v223 = vsel %vm205, %v221, %v222
    %v224 = vrot.slane %v87, 3
    %v225 = vrot.slane %v88, 3
    %v226 = vsel %vm205, %v224, %v225
    %v227 = vrot.slane %v89, 3
    %v228 = vrot.slane %v90, 3
    %v229 = vsel %vm205, %v227, %v228
    %230 = vrot.lane.b32.xlu0 %v208, 48
    %v231 = vpop.permute.xlu0 %230
    %232 = vrot.lane.b32.xlu0 %v211, 48
    %v233 = vpop.permute.xlu0 %232
    %234 = vrot.lane.b32.xlu0 %v214, 48
    %v235 = vpop.permute.xlu0 %234
    %236 = vrot.lane.b32.xlu0 %v217, 48
    %v237 = vpop.permute.xlu0 %236
    %238 = vrot.lane.b32.xlu0 %v220, 48
    %v239 = vpop.permute.xlu0 %238
    %240 = vrot.lane.b32.xlu0 %v223, 48
    %v241 = vpop.permute.xlu0 %240
    %242 = vrot.lane.b32.xlu0 %v226, 48
    %v243 = vpop.permute.xlu0 %242
    %244 = vrot.lane.b32.xlu0 %v229, 48
    %v245 = vpop.permute.xlu0 %244
    %vm254 = vcmask 1043456
    %v255 = vrot.slane %v75, 4
    %v256 = vrot.slane %v76, 4
    %v257 = vsel %vm254, %v255, %v256
    %v258 = vrot.slane %v77, 4
    %v259 = vrot.slane %v78, 4
    %v260 = vsel %vm254, %v258, %v259
    %v261 = vrot.slane %v79, 4
    %v262 = vrot.slane %v80, 4
    %v263 = vsel %vm254, %v261, %v262
    %v264 = vrot.slane %v81, 4
    %v265 = vrot.slane %v82, 4
    %v266 = vsel %vm254, %v264, %v265
    %v267 = vrot.slane %v83, 4
    %v268 = vrot.slane %v84, 4
    %v269 = vsel %vm254, %v267, %v268
    %v270 = vrot.slane %v85, 4
    %v271 = vrot.slane %v86, 4
    %v272 = vsel %vm254, %v270, %v271
    %v273 = vrot.slane %v87, 4
    %v274 = vrot.slane %v88, 4
    %v275 = vsel %vm254, %v273, %v274
    %v276 = vrot.slane %v89, 4
    %v277 = vrot.slane %v90, 4
    %v278 = vsel %vm254, %v276, %v277
    %279 = vrot.lane.b32.xlu0 %v257, 64
    %v280 = vpop.permute.xlu0 %279
    %281 = vrot.lane.b32.xlu0 %v260, 64
    %v282 = vpop.permute.xlu0 %281
    %283 = vrot.lane.b32.xlu0 %v263, 64
    %v284 = vpop.permute.xlu0 %283
    %285 = vrot.lane.b32.xlu0 %v266, 64
    %v286 = vpop.permute.xlu0 %285
    %287 = vrot.lane.b32.xlu0 %v269, 64
    %v288 = vpop.permute.xlu0 %287
    %289 = vrot.lane.b32.xlu0 %v272, 64
    %v290 = vpop.permute.xlu0 %289
    %291 = vrot.lane.b32.xlu0 %v275, 64
    %v292 = vpop.permute.xlu0 %291
    %293 = vrot.lane.b32.xlu0 %v278, 64
    %v294 = vpop.permute.xlu0 %293
    %vm303 = vcmask 130048
    %v304 = vsel %vm303, %v75, %v133
    %v305 = vsel %vm303, %v77, %v135
    %v306 = vsel %vm303, %v79, %v137
    %v307 = vsel %vm303, %v81, %v139
    %v308 = vsel %vm303, %v83, %v141
    %v309 = vsel %vm303, %v85, %v143
    %v310 = vsel %vm303, %v87, %v145
    %v311 = vsel %vm303, %v89, %v147
    %vm312 = vcmask 261120
    %v313 = vsel %vm312, %v304, %v182
    %v314 = vsel %vm312, %v305, %v184
    %v315 = vsel %vm312, %v306, %v186
    %v316 = vsel %vm312, %v307, %v188
    %v317 = vsel %vm312, %v308, %v190
    %v318 = vsel %vm312, %v309, %v192
    %v319 = vsel %vm312, %v310, %v194
    %v320 = vsel %vm312, %v311, %v196
    %vm321 = vcmask 392192
    %v322 = vsel %vm321, %v313, %v231
    %v323 = vsel %vm321, %v314, %v233
    %v324 = vsel %vm321, %v315, %v235
    %v325 = vsel %vm321, %v316, %v237
    %v326 = vsel %vm321, %v317, %v239
    %v327 = vsel %vm321, %v318, %v241
    %v328 = vsel %vm321, %v319, %v243
    %v329 = vsel %vm321, %v320, %v245
    %vm330 = vcmask 523264
    %v331 = vsel %vm330, %v322, %v280
    %v332 = vsel %vm330, %v323, %v282
    %v333 = vsel %vm330, %v324, %v284
    %v334 = vsel %vm330, %v325, %v286
    %v335 = vsel %vm330, %v326, %v288
    %v336 = vsel %vm330, %v327, %v290
    %v337 = vsel %vm330, %v328, %v292
    %v338 = vsel %vm330, %v329, %v294
    %v339 = vpack.c.bf16 %v332, %v331
    %v340 = vpack.c.bf16 %v334, %v333
    %v341 = vpack.c.bf16 %v336, %v335
    %v342 = vpack.c.bf16 %v338, %v337
    %v343 = vld [vmem:[%s1] sm:$0xf]
    %v344 = vld [vmem:[%s1 + $0x4] sm:$0xf]
    %v345 = vld [vmem:[%s1 + $0x8] sm:$0xf]
    %v346 = vld [vmem:[%s1 + $0xc] sm:$0xf]
    %v347 = vld [vmem:[%s1 + $0x10] sm:$0xf]
    %v348 = vld [vmem:[%s1 + $0x14] sm:$0xf]
    %v349 = vld [vmem:[%s1 + $0x18] sm:$0xf]
    %v350 = vld [vmem:[%s1 + $0x1c] sm:$0xf]
    %v351 = vld [vmem:[%s1 + $0x20] sm:$0xf]
    %v352 = vld [vmem:[%s1 + $0x24] sm:$0xf]
    %v353 = vld [vmem:[%s2] sm:$0x1]
    %v355 = vlaneseq
    %v356 = vshrl.u32 %v355, 7
    %v357 = vsub.s32 0, %v356
    %v358 = vrot.slane %v353, %v357
    %v370 = vunpack.c.l.b16 %v343
    %v371 = vunpack.c.l.b16 %v344
    %v372 = vunpack.c.l.b16 %v345
    %v373 = vunpack.c.l.b16 %v346
    %v374 = vunpack.c.l.b16 %v347
    %v375 = vunpack.c.l.b16 %v348
    %v376 = vunpack.c.l.b16 %v349
    %v377 = vunpack.c.l.b16 %v350
    %v378 = vunpack.c.l.b16 %v351
    %v379 = vunpack.c.l.b16 %v352
    %v380 = vpack.c.b16 %v371, %v370
    %v381 = vpack.c.b16 %v373, %v372
    %v382 = vpack.c.b16 %v375, %v374
    %v383 = vpack.c.b16 %v377, %v376
    %v384 = vpack.c.b16 %v379, %v378
    %vm390 = vcmask 654336
    %v392 = vsel %vm390, %v339, 0
    %v395 = vsel %vm390, %v340, 0
    %v398 = vsel %vm390, %v341, 0
    %v401 = vsel %vm390, %v342, 0
    %403 = vmatprep.subr.bf16.mxu0 0
    %404 = vmatpush1.bf16.msra.mxu0 0
    %405 = vmatprep.subr.bf16.mxu0 0
    %406 = vmatpush1.bf16.msra.mxu0 0
    %407 = vmatprep.subr.bf16.mxu0 0
    %408 = vmatpush1.bf16.msra.mxu0 0
    %409 = vmatprep.subr.bf16.mxu0 0
    %410 = vmatpush1.bf16.msra.mxu0 %v384
    %411 = vmatprep.subr.bf16.mxu0 0
    %412 = vmatpush1.bf16.msra.mxu0 %v383
    %413 = vmatprep.subr.bf16.mxu0 0
    %414 = vmatpush1.bf16.msra.mxu0 %v382
    %415 = vmatprep.subr.bf16.mxu0 0
    %416 = vmatpush1.bf16.msra.mxu0 %v381
    %417 = vmatprep.subr.bf16.mxu0 0
    %418 = vmatpush1.bf16.msra.mxu0 %v380
    %419 = vmatprep.subr.bf16.mxu0 0
    %420 = vmatpush2.bf16.msra.mxu0 0
    %421 = vmatprep.subr.bf16.mxu0 0
    %422 = vmatpush2.bf16.msra.mxu0 0
    %423 = vmatprep.subr.bf16.mxu0 0
    %424 = vmatpush2.bf16.msra.mxu0 0
    %425 = vmatprep.subr.bf16.mxu0 0
    %426 = vmatpush2.bf16.msra.mxu0 0
    %427 = vmatprep.subr.bf16.mxu0 0
    %428 = vmatpush2.bf16.msra.mxu0 0
    %429 = vmatprep.subr.bf16.mxu0 0
    %430 = vmatpush2.bf16.msra.mxu0 0
    %431 = vmatprep.subr.bf16.mxu0 0
    %432 = vmatpush2.bf16.msra.mxu0 0
    %433 = vmatprep.subr.bf16.mxu0 0
    %434 = vmatpush2.bf16.msra.mxu0 0
    %435 = vmatprep.mubr.bf16.mxu0 0
    %436 = vmatmul.mubr.bf16.gmra.mxu0 %v392
    %v437 = vpop.f32.mrf.mxu0
    %v438 = vadd.f32 %v358, %v437
    %v439 = vpop.f32.mrf.mxu0
    %v440 = vpop.f32.mrf.mxu0
    %v441 = vadd.f32 %v358, %v440
    %v442 = vpop.f32.mrf.mxu0
    %443 = vmatprep.mubr.bf16.mxu0 0
    %444 = vmatmul.mubr.bf16.gmra.mxu0 %v395
    %v445 = vpop.f32.mrf.mxu0
    %v446 = vadd.f32 %v358, %v445
    %v447 = vpop.f32.mrf.mxu0
    %v448 = vpop.f32.mrf.mxu0
    %v449 = vadd.f32 %v358, %v448
    %v450 = vpop.f32.mrf.mxu0
    %451 = vmatprep.mubr.bf16.mxu0 0
    %452 = vmatmul.mubr.bf16.gmra.mxu0 %v398
    %v453 = vpop.f32.mrf.mxu0
    %v454 = vadd.f32 %v358, %v453
    %v455 = vpop.f32.mrf.mxu0
    %v456 = vpop.f32.mrf.mxu0
    %v457 = vadd.f32 %v358, %v456
    %v458 = vpop.f32.mrf.mxu0
    %459 = vmatprep.mubr.bf16.mxu0 0
    %460 = vmatmul.mubr.bf16.gmra.mxu0 %v401
    %v461 = vpop.f32.mrf.mxu0
    %v462 = vadd.f32 %v358, %v461
    %v463 = vpop.f32.mrf.mxu0
    %v464 = vpop.f32.mrf.mxu0
    %v465 = vadd.f32 %v358, %v464
    %v466 = vpop.f32.mrf.mxu0
    %467 = vdwg.mxu0
    %v468 = vmax.f32 %v438, 0.0
    %v469 = vmax.f32 %v441, 0.0
    %v470 = vmax.f32 %v446, 0.0
    %v471 = vmax.f32 %v449, 0.0
    %v472 = vmax.f32 %v454, 0.0
    %v473 = vmax.f32 %v457, 0.0
    %v474 = vmax.f32 %v462, 0.0
    %v475 = vmax.f32 %v465, 0.0
    %476 = vst [vmem:[#allocation7] sm:$0xff] %v468
    %477 = vst [vmem:[#allocation7 + $0x8] sm:$0xff] %v469
    %478 = vst [vmem:[#allocation7 + $0x10] sm:$0xff] %v470
    %479 = vst [vmem:[#allocation7 + $0x18] sm:$0xff] %v471
    %480 = vst [vmem:[#allocation7 + $0x20] sm:$0xff] %v472
    %481 = vst [vmem:[#allocation7 + $0x28] sm:$0xff] %v473
    %482 = vst [vmem:[#allocation7 + $0x30] sm:$0xff] %v474
    %483 = vst [vmem:[#allocation7 + $0x38] sm:$0xff] %v475
    %v484 = vrot.slane %v468, 4
    %v485 = vmax.f32 %v468, %v484
    %v486 = vrot.slane %v485, 2
    %v487 = vmax.f32 %v485, %v486
    %v488 = vrot.slane %v487, 1
    %v489 = vmax.f32 %v487, %v488
    %v490 = vrot.slane %v469, 4
    %v491 = vmax.f32 %v469, %v490
    %v492 = vrot.slane %v491, 2
    %v493 = vmax.f32 %v491, %v492
    %v494 = vrot.slane %v493, 1
    %v495 = vmax.f32 %v493, %v494
    %v496 = vrot.slane %v470, 4
    %v497 = vmax.f32 %v470, %v496
    %v498 = vrot.slane %v497, 2
    %v499 = vmax.f32 %v497, %v498
    %v500 = vrot.slane %v499, 1
    %v501 = vmax.f32 %v499, %v500
    %v502 = vrot.slane %v471, 4
    %v503 = vmax.f32 %v471, %v502
    %v504 = vrot.slane %v503, 2
    %v505 = vmax.f32 %v503, %v504
    %v506 = vrot.slane %v505, 1
    %v507 = vmax.f32 %v505, %v506
    %v508 = vrot.slane %v472, 4
    %v509 = vmax.f32 %v472, %v508
    %v510 = vrot.slane %v509, 2
    %v511 = vmax.f32 %v509, %v510
    %v512 = vrot.slane %v511, 1
    %v513 = vmax.f32 %v511, %v512
    %v514 = vrot.slane %v473, 4
    %v515 = vmax.f32 %v473, %v514
    %v516 = vrot.slane %v515, 2
    %v517 = vmax.f32 %v515, %v516
    %v518 = vrot.slane %v517, 1
    %v519 = vmax.f32 %v517, %v518
    %v520 = vrot.slane %v474, 4
    %v521 = vmax.f32 %v474, %v520
    %v522 = vrot.slane %v521, 2
    %v523 = vmax.f32 %v521, %v522
    %v524 = vrot.slane %v523, 1
    %v525 = vmax.f32 %v523, %v524
    %v526 = vrot.slane %v475, 4
    %v527 = vmax.f32 %v475, %v526
    %v528 = vrot.slane %v527, 2
    %v529 = vmax.f32 %v527, %v528
    %v530 = vrot.slane %v529, 1
    %v531 = vmax.f32 %v529, %v530
    %v532 = vpack.c.bf16 %v489, %v489
    %v533 = vpack.c.bf16 %v495, %v495
    %v534 = vpack.c.bf16 %v501, %v501
    %v535 = vpack.c.bf16 %v507, %v507
    %v536 = vpack.c.bf16 %v513, %v513
    %v537 = vpack.c.bf16 %v519, %v519
    %v538 = vpack.c.bf16 %v525, %v525
    %v539 = vpack.c.bf16 %v531, %v531
    %v540 = vld [vmem:[#allocation2] sm:$0xf]
    %v541 = vld [vmem:[#allocation2 + $0x4] sm:$0xf]
    %v542 = vld [vmem:[#allocation2 + $0x8] sm:$0xf]
    %v543 = vld [vmem:[#allocation2 + $0xc] sm:$0xf]
    %v544 = vld [vmem:[#allocation2 + $0x10] sm:$0xf]
    %v545 = vld [vmem:[#allocation2 + $0x14] sm:$0xf]
    %v546 = vld [vmem:[#allocation2 + $0x18] sm:$0xf]
    %v547 = vld [vmem:[#allocation2 + $0x1c] sm:$0xf]
    %v548 = vld [vmem:[#allocation2 + $0x20] sm:$0xf]
    %v549 = vld [vmem:[#allocation2 + $0x24] sm:$0xf]
    %v550 = vld [vmem:[#allocation2 + $0x28] sm:$0xf]
    %v551 = vld [vmem:[#allocation2 + $0x2c] sm:$0xf]
    %v552 = vld [vmem:[#allocation2 + $0x30] sm:$0xf]
    %v553 = vld [vmem:[#allocation2 + $0x34] sm:$0xf]
    %v554 = vld [vmem:[#allocation2 + $0x38] sm:$0xf]
    %v555 = vld [vmem:[#allocation2 + $0x3c] sm:$0xf]
    %v556 = vld [vmem:[%s5] sm:$0x1]
    %v558 = vlaneseq
    %v559 = vshrl.u32 %v558, 7
    %v560 = vsub.s32 0, %v559
    %v561 = vrot.slane %v556, %v560
    %v571 = vunpack.c.l.b16 %v532
    %v572 = vunpack.c.l.b16 %v533
    %v573 = vunpack.c.l.b16 %v534
    %v574 = vunpack.c.l.b16 %v535
    %v575 = vunpack.c.l.b16 %v536
    %v576 = vunpack.c.l.b16 %v537
    %v577 = vunpack.c.l.b16 %v538
    %v578 = vunpack.c.l.b16 %v539
    %vm579 = vcmask 1041409
    %v580 = vsel %vm579, %v572, %v571
    %vm581 = vcmask 1042434
    %v582 = vsel %vm581, %v573, %v580
    %vm583 = vcmask 1043459
    %v584 = vsel %vm583, %v574, %v582
    %vm585 = vcmask 1044484
    %v586 = vsel %vm585, %v575, %v584
    %vm587 = vcmask 1045509
    %v588 = vsel %vm587, %v576, %v586
    %vm589 = vcmask 1046534
    %v590 = vsel %vm589, %v577, %v588
    %vm591 = vcmask 1047559
    %v592 = vsel %vm591, %v578, %v590
    %v593 = vpack.c.b16 %v592, %v592
    %v611 = vunpack.c.l.b16 %v540
    %v612 = vunpack.c.l.b16 %v541
    %v613 = vunpack.c.l.b16 %v542
    %v614 = vunpack.c.l.b16 %v543
    %v615 = vunpack.c.l.b16 %v544
    %v616 = vunpack.c.l.b16 %v545
    %v617 = vunpack.c.l.b16 %v546
    %v618 = vunpack.c.l.b16 %v547
    %v619 = vunpack.c.l.b16 %v548
    %v620 = vunpack.c.l.b16 %v549
    %v621 = vunpack.c.l.b16 %v550
    %v622 = vunpack.c.l.b16 %v551
    %v623 = vunpack.c.l.b16 %v552
    %v624 = vunpack.c.l.b16 %v553
    %v625 = vunpack.c.l.b16 %v554
    %v626 = vunpack.c.l.b16 %v555
    %v627 = vpack.c.b16 %v612, %v611
    %v628 = vpack.c.b16 %v614, %v613
    %v629 = vpack.c.b16 %v616, %v615
    %v630 = vpack.c.b16 %v618, %v617
    %v631 = vpack.c.b16 %v620, %v619
    %v632 = vpack.c.b16 %v622, %v621
    %v633 = vpack.c.b16 %v624, %v623
    %v634 = vpack.c.b16 %v626, %v625
    %643 = vmatprep.subr.bf16.mxu0 0
    %644 = vmatpush1.bf16.msra.mxu0 %v634
    %645 = vmatprep.subr.bf16.mxu0 0
    %646 = vmatpush1.bf16.msra.mxu0 %v633
    %647 = vmatprep.subr.bf16.mxu0 0
    %648 = vmatpush1.bf16.msra.mxu0 %v632
    %649 = vmatprep.subr.bf16.mxu0 0
    %650 = vmatpush1.bf16.msra.mxu0 %v631
    %651 = vmatprep.subr.bf16.mxu0 0
    %652 = vmatpush1.bf16.msra.mxu0 %v630
    %653 = vmatprep.subr.bf16.mxu0 0
    %654 = vmatpush1.bf16.msra.mxu0 %v629
    %655 = vmatprep.subr.bf16.mxu0 0
    %656 = vmatpush1.bf16.msra.mxu0 %v628
    %657 = vmatprep.subr.bf16.mxu0 0
    %658 = vmatpush1.bf16.msra.mxu0 %v627
    %659 = vmatprep.subr.bf16.mxu0 0
    %660 = vmatpush2.bf16.msra.mxu0 0
    %661 = vmatprep.subr.bf16.mxu0 0
    %662 = vmatpush2.bf16.msra.mxu0 0
    %663 = vmatprep.subr.bf16.mxu0 0
    %664 = vmatpush2.bf16.msra.mxu0 0
    %665 = vmatprep.subr.bf16.mxu0 0
    %666 = vmatpush2.bf16.msra.mxu0 0
    %667 = vmatprep.subr.bf16.mxu0 0
    %668 = vmatpush2.bf16.msra.mxu0 0
    %669 = vmatprep.subr.bf16.mxu0 0
    %670 = vmatpush2.bf16.msra.mxu0 0
    %671 = vmatprep.subr.bf16.mxu0 0
    %672 = vmatpush2.bf16.msra.mxu0 0
    %673 = vmatprep.subr.bf16.mxu0 0
    %674 = vmatpush2.bf16.msra.mxu0 0
    %675 = vmatprep.mubr.bf16.mxu0 0
    %676 = vmatmul.mubr.bf16.gmra.mxu0 %v593
    %v677 = vpop.f32.mrf.mxu0
    %v678 = vadd.f32 %v561, %v677
    %v679 = vpop.f32.mrf.mxu0
    %v680 = vpop.f32.mrf.mxu0
    %v681 = vpop.f32.mrf.mxu0
    %682 = vdwg.mxu0
    %v683 = vmax.f32 %v678, 0.0
    %v684 = vld [vmem:[#allocation5] sm:$0xf]
    %v685 = vld [vmem:[#allocation5 + $0x4] sm:$0xf]
    %v686 = vld [vmem:[#allocation5 + $0x8] sm:$0xf]
    %v687 = vld [vmem:[#allocation5 + $0xc] sm:$0xf]
    %v688 = vld [vmem:[#allocation5 + $0x10] sm:$0xf]
    %v689 = vld [vmem:[#allocation5 + $0x14] sm:$0xf]
    %v690 = vld [vmem:[#allocation5 + $0x18] sm:$0xf]
    %v691 = vld [vmem:[#allocation5 + $0x1c] sm:$0xf]
    %v692 = vld [vmem:[#allocation5 + $0x20] sm:$0xf]
    %v693 = vld [vmem:[#allocation5 + $0x24] sm:$0xf]
    %v694 = vld [vmem:[#allocation5 + $0x28] sm:$0xf]
    %v695 = vld [vmem:[#allocation5 + $0x2c] sm:$0xf]
    %v696 = vld [vmem:[#allocation5 + $0x30] sm:$0xf]
    %v697 = vld [vmem:[#allocation5 + $0x34] sm:$0xf]
    %v698 = vld [vmem:[#allocation5 + $0x38] sm:$0xf]
    %v699 = vld [vmem:[#allocation5 + $0x3c] sm:$0xf]
    %v700 = vld [vmem:[%s6] sm:$0x1]
    %v702 = vlaneseq
    %v703 = vshrl.u32 %v702, 7
    %v704 = vsub.s32 0, %v703
    %v705 = vrot.slane %v700, %v704
    %v723 = vunpack.c.l.b16 %v684
    %v724 = vunpack.c.l.b16 %v685
    %v725 = vunpack.c.l.b16 %v686
    %v726 = vunpack.c.l.b16 %v687
    %v727 = vunpack.c.l.b16 %v688
    %v728 = vunpack.c.l.b16 %v689
    %v729 = vunpack.c.l.b16 %v690
    %v730 = vunpack.c.l.b16 %v691
    %v731 = vunpack.c.l.b16 %v692
    %v732 = vunpack.c.l.b16 %v693
    %v733 = vunpack.c.l.b16 %v694
    %v734 = vunpack.c.l.b16 %v695
    %v735 = vunpack.c.l.b16 %v696
    %v736 = vunpack.c.l.b16 %v697
    %v737 = vunpack.c.l.b16 %v698
    %v738 = vunpack.c.l.b16 %v699
    %v739 = vpack.c.b16 %v724, %v723
    %v740 = vpack.c.b16 %v726, %v725
    %v741 = vpack.c.b16 %v728, %v727
    %v742 = vpack.c.b16 %v730, %v729
    %v743 = vpack.c.b16 %v732, %v731
    %v744 = vpack.c.b16 %v734, %v733
    %v745 = vpack.c.b16 %v736, %v735
    %v746 = vpack.c.b16 %v738, %v737
    %755 = vmatprep.subr.bf16.mxu0 0
    %756 = vmatpush1.bf16.msra.mxu0 %v746
    %757 = vmatprep.subr.bf16.mxu0 0
    %758 = vmatpush1.bf16.msra.mxu0 %v745
    %759 = vmatprep.subr.bf16.mxu0 0
    %760 = vmatpush1.bf16.msra.mxu0 %v744
    %761 = vmatprep.subr.bf16.mxu0 0
    %762 = vmatpush1.bf16.msra.mxu0 %v743
    %763 = vmatprep.subr.bf16.mxu0 0
    %764 = vmatpush1.bf16.msra.mxu0 %v742
    %765 = vmatprep.subr.bf16.mxu0 0
    %766 = vmatpush1.bf16.msra.mxu0 %v741
    %767 = vmatprep.subr.bf16.mxu0 0
    %768 = vmatpush1.bf16.msra.mxu0 %v740
    %769 = vmatprep.subr.bf16.mxu0 0
    %770 = vmatpush1.bf16.msra.mxu0 %v739
    %771 = vmatprep.subr.bf16.mxu0 0
    %772 = vmatpush2.bf16.msra.mxu0 0
    %773 = vmatprep.subr.bf16.mxu0 0
    %774 = vmatpush2.bf16.msra.mxu0 0
    %775 = vmatprep.subr.bf16.mxu0 0
    %776 = vmatpush2.bf16.msra.mxu0 0
    %777 = vmatprep.subr.bf16.mxu0 0
    %778 = vmatpush2.bf16.msra.mxu0 0
    %779 = vmatprep.subr.bf16.mxu0 0
    %780 = vmatpush2.bf16.msra.mxu0 0
    %781 = vmatprep.subr.bf16.mxu0 0
    %782 = vmatpush2.bf16.msra.mxu0 0
    %783 = vmatprep.subr.bf16.mxu0 0
    %784 = vmatpush2.bf16.msra.mxu0 0
    %785 = vmatprep.subr.bf16.mxu0 0
    %786 = vmatpush2.bf16.msra.mxu0 0
    %787 = vmatprep.mubr.bf16.mxu0 0
    %788 = vmatmul.mubr.bf16.gmra.mxu0 %v593
    %v789 = vpop.f32.mrf.mxu0
    %v790 = vadd.f32 %v705, %v789
    %v791 = vpop.f32.mrf.mxu0
    %v792 = vpop.f32.mrf.mxu0
    %v793 = vpop.f32.mrf.mxu0
    %794 = vdwg.mxu0
    %v795 = vxor.u32 %v790, 2147483648
    %v796 = vmul.f32 %v795, 1.442695
    %v797 = vpow.pop %v796
    %v798 = vadd.f32 %v797, 1.0
    %v799 = vrcp.pop %v798
    %v800 = vmul.f32 1.0, %v799
    %v809 = vsel %vm579, %v495, %v489
    %v810 = vsel %vm581, %v501, %v809
    %v811 = vsel %vm583, %v507, %v810
    %v812 = vsel %vm585, %v513, %v811
    %v813 = vsel %vm587, %v519, %v812
    %v814 = vsel %vm589, %v525, %v813
    %v815 = vsel %vm591, %v531, %v814
    %v817 = vmul.f32 %v800, %v815
    %v818 = vsub.f32 1.0, %v800
    %v819 = vmul.f32 %v818, %v683
    %v820 = vadd.f32 %v817, %v819
    %v821 = vpack.c.bf16 %v820, %v820
    %s822 = scalar_lea.vmem [#allocation2], 64
    %v823 = vld [vmem:[%s822] sm:$0xf]
    %v824 = vld [vmem:[%s822 + $0x4] sm:$0xf]
    %v825 = vld [vmem:[%s822 + $0x8] sm:$0xf]
    %v826 = vld [vmem:[%s822 + $0xc] sm:$0xf]
    %v827 = vld [vmem:[%s822 + $0x10] sm:$0xf]
    %v828 = vld [vmem:[%s822 + $0x14] sm:$0xf]
    %v829 = vld [vmem:[%s822 + $0x18] sm:$0xf]
    %v830 = vld [vmem:[%s822 + $0x1c] sm:$0xf]
    %v831 = vld [vmem:[%s822 + $0x20] sm:$0xf]
    %v832 = vld [vmem:[%s822 + $0x24] sm:$0xf]
    %v833 = vld [vmem:[%s822 + $0x28] sm:$0xf]
    %v834 = vld [vmem:[%s822 + $0x2c] sm:$0xf]
    %v835 = vld [vmem:[%s822 + $0x30] sm:$0xf]
    %v836 = vld [vmem:[%s822 + $0x34] sm:$0xf]
    %v837 = vld [vmem:[%s822 + $0x38] sm:$0xf]
    %v838 = vld [vmem:[%s822 + $0x3c] sm:$0xf]
    %s839 = scalar_lea.vmem %s5, 1
    %v840 = vld [vmem:[%s839] sm:$0x1]
    %v842 = vlaneseq
    %v843 = vshrl.u32 %v842, 7
    %v844 = vsub.s32 0, %v843
    %v845 = vrot.slane %v840, %v844
    %v863 = vunpack.c.l.b16 %v823
    %v864 = vunpack.c.l.b16 %v824
    %v865 = vunpack.c.l.b16 %v825
    %v866 = vunpack.c.l.b16 %v826
    %v867 = vunpack.c.l.b16 %v827
    %v868 = vunpack.c.l.b16 %v828
    %v869 = vunpack.c.l.b16 %v829
    %v870 = vunpack.c.l.b16 %v830
    %v871 = vunpack.c.l.b16 %v831
    %v872 = vunpack.c.l.b16 %v832
    %v873 = vunpack.c.l.b16 %v833
    %v874 = vunpack.c.l.b16 %v834
    %v875 = vunpack.c.l.b16 %v835
    %v876 = vunpack.c.l.b16 %v836
    %v877 = vunpack.c.l.b16 %v837
    %v878 = vunpack.c.l.b16 %v838
    %v879 = vpack.c.b16 %v864, %v863
    %v880 = vpack.c.b16 %v866, %v865
    %v881 = vpack.c.b16 %v868, %v867
    %v882 = vpack.c.b16 %v870, %v869
    %v883 = vpack.c.b16 %v872, %v871
    %v884 = vpack.c.b16 %v874, %v873
    %v885 = vpack.c.b16 %v876, %v875
    %v886 = vpack.c.b16 %v878, %v877
    %895 = vmatprep.subr.bf16.mxu0 0
    %896 = vmatpush1.bf16.msra.mxu0 %v886
    %897 = vmatprep.subr.bf16.mxu0 0
    %898 = vmatpush1.bf16.msra.mxu0 %v885
    %899 = vmatprep.subr.bf16.mxu0 0
    %900 = vmatpush1.bf16.msra.mxu0 %v884
    %901 = vmatprep.subr.bf16.mxu0 0
    %902 = vmatpush1.bf16.msra.mxu0 %v883
    %903 = vmatprep.subr.bf16.mxu0 0
    %904 = vmatpush1.bf16.msra.mxu0 %v882
    %905 = vmatprep.subr.bf16.mxu0 0
    %906 = vmatpush1.bf16.msra.mxu0 %v881
    %907 = vmatprep.subr.bf16.mxu0 0
    %908 = vmatpush1.bf16.msra.mxu0 %v880
    %909 = vmatprep.subr.bf16.mxu0 0
    %910 = vmatpush1.bf16.msra.mxu0 %v879
    %911 = vmatprep.subr.bf16.mxu0 0
    %912 = vmatpush2.bf16.msra.mxu0 0
    %913 = vmatprep.subr.bf16.mxu0 0
    %914 = vmatpush2.bf16.msra.mxu0 0
    %915 = vmatprep.subr.bf16.mxu0 0
    %916 = vmatpush2.bf16.msra.mxu0 0
    %917 = vmatprep.subr.bf16.mxu0 0
    %918 = vmatpush2.bf16.msra.mxu0 0
    %919 = vmatprep.subr.bf16.mxu0 0
    %920 = vmatpush2.bf16.msra.mxu0 0
    %921 = vmatprep.subr.bf16.mxu0 0
    %922 = vmatpush2.bf16.msra.mxu0 0
    %923 = vmatprep.subr.bf16.mxu0 0
    %924 = vmatpush2.bf16.msra.mxu0 0
    %925 = vmatprep.subr.bf16.mxu0 0
    %926 = vmatpush2.bf16.msra.mxu0 0
    %927 = vmatprep.mubr.bf16.mxu0 0
    %928 = vmatmul.mubr.bf16.gmra.mxu0 %v821
    %v929 = vpop.f32.mrf.mxu0
    %v930 = vadd.f32 %v845, %v929
    %v931 = vpop.f32.mrf.mxu0
    %v932 = vpop.f32.mrf.mxu0
    %v933 = vpop.f32.mrf.mxu0
    %934 = vdwg.mxu0
    %v935 = vmax.f32 %v930, 0.0
    %s936 = scalar_lea.vmem [#allocation5], 64
    %v937 = vld [vmem:[%s936] sm:$0xf]
    %v938 = vld [vmem:[%s936 + $0x4] sm:$0xf]
    %v939 = vld [vmem:[%s936 + $0x8] sm:$0xf]
    %v940 = vld [vmem:[%s936 + $0xc] sm:$0xf]
    %v941 = vld [vmem:[%s936 + $0x10] sm:$0xf]
    %v942 = vld [vmem:[%s936 + $0x14] sm:$0xf]
    %v943 = vld [vmem:[%s936 + $0x18] sm:$0xf]
    %v944 = vld [vmem:[%s936 + $0x1c] sm:$0xf]
    %v945 = vld [vmem:[%s936 + $0x20] sm:$0xf]
    %v946 = vld [vmem:[%s936 + $0x24] sm:$0xf]
    %v947 = vld [vmem:[%s936 + $0x28] sm:$0xf]
    %v948 = vld [vmem:[%s936 + $0x2c] sm:$0xf]
    %v949 = vld [vmem:[%s936 + $0x30] sm:$0xf]
    %v950 = vld [vmem:[%s936 + $0x34] sm:$0xf]
    %v951 = vld [vmem:[%s936 + $0x38] sm:$0xf]
    %v952 = vld [vmem:[%s936 + $0x3c] sm:$0xf]
    %s953 = scalar_lea.vmem %s6, 1
    %v954 = vld [vmem:[%s953] sm:$0x1]
    %v956 = vlaneseq
    %v957 = vshrl.u32 %v956, 7
    %v958 = vsub.s32 0, %v957
    %v959 = vrot.slane %v954, %v958
    %v977 = vunpack.c.l.b16 %v937
    %v978 = vunpack.c.l.b16 %v938
    %v979 = vunpack.c.l.b16 %v939
    %v980 = vunpack.c.l.b16 %v940
    %v981 = vunpack.c.l.b16 %v941
    %v982 = vunpack.c.l.b16 %v942
    %v983 = vunpack.c.l.b16 %v943
    %v984 = vunpack.c.l.b16 %v944
    %v985 = vunpack.c.l.b16 %v945
    %v986 = vunpack.c.l.b16 %v946
    %v987 = vunpack.c.l.b16 %v947
    %v988 = vunpack.c.l.b16 %v948
    %v989 = vunpack.c.l.b16 %v949
    %v990 = vunpack.c.l.b16 %v950
    %v991 = vunpack.c.l.b16 %v951
    %v992 = vunpack.c.l.b16 %v952
    %v993 = vpack.c.b16 %v978, %v977
    %v994 = vpack.c.b16 %v980, %v979
    %v995 = vpack.c.b16 %v982, %v981
    %v996 = vpack.c.b16 %v984, %v983
    %v997 = vpack.c.b16 %v986, %v985
    %v998 = vpack.c.b16 %v988, %v987
    %v999 = vpack.c.b16 %v990, %v989
    %v1000 = vpack.c.b16 %v992, %v991
    %1009 = vmatprep.subr.bf16.mxu0 0
    %1010 = vmatpush1.bf16.msra.mxu0 %v1000
    %1011 = vmatprep.subr.bf16.mxu0 0
    %1012 = vmatpush1.bf16.msra.mxu0 %v999
    %1013 = vmatprep.subr.bf16.mxu0 0
    %1014 = vmatpush1.bf16.msra.mxu0 %v998
    %1015 = vmatprep.subr.bf16.mxu0 0
    %1016 = vmatpush1.bf16.msra.mxu0 %v997
    %1017 = vmatprep.subr.bf16.mxu0 0
    %1018 = vmatpush1.bf16.msra.mxu0 %v996
    %1019 = vmatprep.subr.bf16.mxu0 0
    %1020 = vmatpush1.bf16.msra.mxu0 %v995
    %1021 = vmatprep.subr.bf16.mxu0 0
    %1022 = vmatpush1.bf16.msra.mxu0 %v994
    %1023 = vmatprep.subr.bf16.mxu0 0
    %1024 = vmatpush1.bf16.msra.mxu0 %v993
    %1025 = vmatprep.subr.bf16.mxu0 0
    %1026 = vmatpush2.bf16.msra.mxu0 0
    %1027 = vmatprep.subr.bf16.mxu0 0
    %1028 = vmatpush2.bf16.msra.mxu0 0
    %1029 = vmatprep.subr.bf16.mxu0 0
    %1030 = vmatpush2.bf16.msra.mxu0 0
    %1031 = vmatprep.subr.bf16.mxu0 0
    %1032 = vmatpush2.bf16.msra.mxu0 0
    %1033 = vmatprep.subr.bf16.mxu0 0
    %1034 = vmatpush2.bf16.msra.mxu0 0
    %1035 = vmatprep.subr.bf16.mxu0 0
    %1036 = vmatpush2.bf16.msra.mxu0 0
    %1037 = vmatprep.subr.bf16.mxu0 0
    %1038 = vmatpush2.bf16.msra.mxu0 0
    %1039 = vmatprep.subr.bf16.mxu0 0
    %1040 = vmatpush2.bf16.msra.mxu0 0
    %1041 = vmatprep.mubr.bf16.mxu0 0
    %1042 = vmatmul.mubr.bf16.gmra.mxu0 %v821
    %v1043 = vpop.f32.mrf.mxu0
    %v1044 = vadd.f32 %v959, %v1043
    %v1045 = vpop.f32.mrf.mxu0
    %v1046 = vpop.f32.mrf.mxu0
    %v1047 = vpop.f32.mrf.mxu0
    %1048 = vdwg.mxu0
    %v1049 = vxor.u32 %v1044, 2147483648
    %v1050 = vmul.f32 %v1049, 1.442695
    %v1051 = vpow.pop %v1050
    %v1052 = vadd.f32 %v1051, 1.0
    %v1053 = vrcp.pop %v1052
    %v1054 = vmul.f32 1.0, %v1053
    %v1055 = vmul.f32 %v1054, %v820
    %v1056 = vsub.f32 1.0, %v1054
    %v1057 = vmul.f32 %v1056, %v935
    %v1058 = vadd.f32 %v1055, %v1057
    %1059 = vst [vmem:[#allocation8] sm:$0xff] %v1058
    // Predicated region
    $region38: #{tpu_custom_call.1} parent=1 // pred_check
      _
    $region39: #{tpu_custom_call.1} parent=1 // pred_check_branch
      %1061 = sbr.rel (0) target = $region41
    $region40: #{tpu_custom_call.1} parent=1 // pred_region
      %s1063 = ssub.s32 1024, 1024
      %1064 = vsyncadd [#allocation4], %s1063
      %s1065 = sshll.u32 [#allocation7], 4
      %s1066 = int_to_ptr.vmem [resolvable:$true] %s1065
      %1071 = dma.vmem_to_hbm [thread:$0]  %s1066, 1024, %s7, [#allocation4], 128, 128, 8
    $region41: #{tpu_custom_call.1} parent=1 // pred_fallthru
      _
    // Predicated region
    $region42: #{tpu_custom_call.1} parent=1 // pred_check
      _
    $region43: #{tpu_custom_call.1} parent=1 // pred_check_branch
      %1073 = sbr.rel (0) target = $region45
    $region44: #{tpu_custom_call.1} parent=1 // pred_region
      %s1075 = ssub.s32 128, 128
      %1076 = vsyncadd [#allocation9], %s1075
      %s1078 = sshll.u32 [#allocation8], 4
      %s1079 = int_to_ptr.vmem [resolvable:$true] %s1078
      %1081 = dma.vmem_to_hbm [thread:$0]  %s1079, 128, %s8, [#allocation9]
    $region45: #{tpu_custom_call.1} parent=1 // pred_fallthru
      _
    // Predicated region
    $region46: #{tpu_custom_call.1} parent=1 // pred_check
      _
    $region47: #{tpu_custom_call.1} parent=1 // pred_check_branch
      %1083 = sbr.rel (0) target = $region49
    $region48: #{tpu_custom_call.1} parent=1 // pred_region
      %1084 = dma.done [#allocation4], 1024
    $region49: #{tpu_custom_call.1} parent=1 // pred_fallthru
      _
    // Predicated region
    $region50: #{tpu_custom_call.1} parent=1 // pred_check
      _
    $region51: #{tpu_custom_call.1} parent=1 // pred_check_branch
      %1086 = sbr.rel (0) target = $region53
    $region52: #{tpu_custom_call.1} parent=1 // pred_region
      %1087 = dma.done [#allocation9], 128
    $region53: #{tpu_custom_call.1} parent=1 // pred_fallthru
      _
    %1088 = vsyncpa [#allocation3], 1
    %1089 = vsyncpa [#allocation6], 1
    %1090 = vsyncpa [#allocation4], 1
    %1091 = vsyncpa [#allocation9], 1

</llo_original>
